<compile_context>
chip_gen: v7x
topology: tpu7x:2x2x1
jax: 0.10.0
libtpu: 0.0.40
codegen_flags: <defaults>
</compile_context>

<pallas_src>
import functools

import jax
import jax.numpy as jnp
from jax.experimental import pallas as pl
from jax.experimental.pallas import tpu as pltpu


# --------------------------------------------------------------------------
# Kernel (transposed / lane-dense layout)
# --------------------------------------------------------------------------
def _gresblock_kernel(xT_ref, adjT_ref, w1T_ref, wl1T_ref, b1T_ref,
                      w2T_ref, wl2T_ref, b2T_ref, oT_ref,
                      *, use_act, col_sizes):
    """One grid step: a (Fin, cstep) column slab; static loop over sub-slabs.

    Shapes (per sub-slab of `cs` columns, columns = batch*vertex):
      xT   (Fin, cs)     adjT (cs, cs)  block-diag kron(I, adj^T)
      w1T/wl1T (H, Fin)  b1T (H, 1)     w2T/wl2T (Fin, H)  b2T (Fin, 1)
    """
    mxu = adjT_ref.dtype

    # Grid-invariant operands: load once per grid step.
    w1T = w1T_ref[...]
    wl1T = wl1T_ref[...]
    b1T = b1T_ref[...]        # (H, 1)  f32
    w2T = w2T_ref[...]
    wl2T = wl2T_ref[...]
    b2T = b2T_ref[...]        # (Fin, 1) f32

    c0 = 0
    for cs in col_sizes:      # static Python loop -> static slices (zero-cost views)
        adjT = adjT_ref[:cs, :cs]                 # prefix of block-diag is block-diag
        xT = xT_ref[:, c0:c0 + cs]                # (Fin, cs) input dtype (residual path)
        xTm = xT.astype(mxu)

        # ---- GConv 1 (reassociated):  h^T = W1^T @ (x^T @ adj^T) + WL1^T @ x^T + b1^T
        axT = jnp.dot(xTm, adjT, preferred_element_type=jnp.float32).astype(mxu)
        hT = (jnp.dot(w1T, axT, preferred_element_type=jnp.float32)
              + jnp.dot(wl1T, xTm, preferred_element_type=jnp.float32)
              + b1T)                                                # (H, cs) f32
        if use_act:
            hT = jnp.maximum(hT, 0.0)
        hTm = hT.astype(mxu)

        # ---- GConv 2:  y^T = (W2^T @ h^T) @ adj^T + WL2^T @ h^T + b2^T
        sT = jnp.dot(w2T, hTm, preferred_element_type=jnp.float32).astype(mxu)
        yT = (jnp.dot(sT, adjT, preferred_element_type=jnp.float32)
              + jnp.dot(wl2T, hTm, preferred_element_type=jnp.float32)
              + b2T)                                                # (Fin, cs) f32
        if use_act:
            yT = jnp.maximum(yT, 0.0)

        # ---- residual average (f32, un-rounded x); lane-dense store
        oT_ref[:, c0:c0 + cs] = ((xT.astype(jnp.float32) + yT) * 0.5).astype(oT_ref.dtype)
        c0 += cs


# --------------------------------------------------------------------------
# Tiling plan
# --------------------------------------------------------------------------
def _num_tensorcores():
    """Best-effort TensorCores-per-chip detection (2 on v7x, 1 on v5e/v6e)."""
    try:
        info = pltpu.get_tpu_info()
        for attr in ("num_cores", "core_count", "num_tensorcores", "tensorcore_count"):
            v = getattr(info, attr, None)
            if v:
                return max(1, int(v))
    except Exception:
        pass
    return 1


def _pick_bsub(batch, n_vert):
    """Batch elements per adjacency sub-block: fill ~256 columns, prefer a
    128-lane-aligned column count when one exists (enables clean multi-step
    tiling), never exceed the actual batch."""
    cap = max(1, 256 // n_vert) if n_vert <= 256 else 1
    cap = min(cap, batch)
    for b in range(cap, 0, -1):
        if (b * n_vert) % 128 == 0:
            return b
    return cap


def _steps_for(rows, csub, *, num_tc=1, single_step_cap=2048, step_col_cap=1024):
    """Columns per grid step and number of grid steps for `rows` total columns."""
    if rows <= csub:
        return rows, 1                      # whole problem is one sub-slab
    if csub % 128 != 0:
        # TODO(synk): for vertex counts where no batch sub-tile hits a 128-lane
        # multiple we fall back to a single (possibly large) grid step instead
        # of padding the batch through HBM.
        return rows, 1
    if rows <= single_step_cap and num_tc < 2:
        return rows, 1                      # single-TC chips: fewest steps wins
    n_sub = max(1, step_col_cap // csub)
    if num_tc >= 2:
        # keep at least num_tc "parallel" grid steps so every core gets work
        n_sub = min(n_sub, max(1, pl.cdiv(pl.cdiv(rows, csub), num_tc)))
    cstep = n_sub * csub
    return cstep, pl.cdiv(rows, cstep)


# --------------------------------------------------------------------------
# Wrappers
# --------------------------------------------------------------------------
def pack_gresblock_params(adj, params, batch, *, mxu_dtype=jnp.bfloat16):
    """Pre-pack all grid-invariant operands once (hoisted out of the hot loop)."""
    adj = jnp.asarray(adj, jnp.float32)
    n_vert = adj.shape[0]
    bsub = _pick_bsub(batch, n_vert)
    adjT_bd = jnp.kron(jnp.eye(bsub, dtype=jnp.float32), adj.T).astype(mxu_dtype)

    def _t(a):
        return jnp.asarray(a, jnp.float32).T.astype(mxu_dtype)

    return {
        "adjT_bd": adjT_bd,                                              # (csub, csub)
        "w1T": _t(params["w1"]),                                         # (H, Fin)
        "wl1T": _t(params["wl1"]),                                       # (H, Fin)
        "b1T": jnp.asarray(params["b1"], jnp.float32).reshape(-1, 1),    # (H, 1)
        "w2T": _t(params["w2"]),                                         # (Fin, H)
        "wl2T": _t(params["wl2"]),                                       # (Fin, H)
        "b2T": jnp.asarray(params["b2"], jnp.float32).reshape(-1, 1),    # (Fin, 1)
        "n_vert": n_vert,
    }


def gresblock_apply(x, packed, *, activation=False):
    """x: (B, N, Fin) -> (B, N, Fin), using pre-packed operands."""
    B, N, Fin = x.shape
    if N != packed["n_vert"]:
        raise ValueError("vertex count of x does not match packed adjacency")
    rows = B * N
    csub = packed["adjT_bd"].shape[0]
    H = packed["w1T"].shape[0]

    cstep, n_steps = _steps_for(rows, csub, num_tc=_num_tensorcores())
    n_full, rem = divmod(cstep, csub)
    col_sizes = (csub,) * n_full + ((rem,) if rem else ())

    # Lane-dense layout plumbing (outside the kernel): (B, N, Fin) -> (Fin, B*N).
    xT = x.reshape(rows, Fin).T

    kernel = functools.partial(_gresblock_kernel, use_act=activation,
                               col_sizes=col_sizes)
    outT = pl.pallas_call(
        kernel,
        out_shape=jax.ShapeDtypeStruct((Fin, rows), x.dtype),
        grid=(n_steps,),
        in_specs=[
            pl.BlockSpec((Fin, cstep), lambda i: (0, i)),    # xT column slab (per step)
            pl.BlockSpec((csub, csub), lambda i: (0, 0)),    # block-diag adj^T (resident)
            pl.BlockSpec((H, Fin), lambda i: (0, 0)),        # W1^T
            pl.BlockSpec((H, Fin), lambda i: (0, 0)),        # WL1^T
            pl.BlockSpec((H, 1), lambda i: (0, 0)),          # b1^T
            pl.BlockSpec((Fin, H), lambda i: (0, 0)),        # W2^T
            pl.BlockSpec((Fin, H), lambda i: (0, 0)),        # WL2^T
            pl.BlockSpec((Fin, 1), lambda i: (0, 0)),        # b2^T
        ],
        out_specs=pl.BlockSpec((Fin, cstep), lambda i: (0, i)),
        compiler_params=pltpu.CompilerParams(
            dimension_semantics=("parallel",)),
    )(xT, packed["adjT_bd"], packed["w1T"], packed["wl1T"], packed["b1T"],
      packed["w2T"], packed["wl2T"], packed["b2T"])

    # Back to the module's (B, N, Fin) layout (layout plumbing, outside kernel).
    return outT.T.reshape(B, N, Fin)


def gresblock(x, adj, params, *, activation=False, mxu_dtype=jnp.bfloat16):
    """Convenience one-shot wrapper: pack + apply."""
    packed = pack_gresblock_params(adj, params, x.shape[0], mxu_dtype=mxu_dtype)
    return gresblock_apply(x, packed, activation=activation)


# --------------------------------------------------------------------------
# Pure-JAX reference (matches the PyTorch module)
# --------------------------------------------------------------------------
def _reference(x, adj, params, *, activation=False):
    def gconv(h, w, wl, b):
        return adj @ (h @ w) + h @ wl + b

    h = gconv(x, params["w1"], params["wl1"], params["b1"])
    if activation:
        h = jnp.maximum(h, 0.0)
    y = gconv(h, params["w2"], params["wl2"], params["b2"])
    if activation:
        y = jnp.maximum(y, 0.0)
    return (x + y) * 0.5


if __name__ == "__main__":
    B, N, IN_DIM, HIDDEN = 5, 16, 8, 32

    key = jax.random.PRNGKey(0)
    kx, kadj, k1, k2, k3, k4, k5, k6 = jax.random.split(key, 8)

    x = jax.random.normal(kx, (B, N, IN_DIM), dtype=jnp.float32)

    # Deterministic symmetric, row-normalized adjacency (with self-loops).
    raw = jax.random.uniform(kadj, (N, N)) < 0.3
    adj = (raw | raw.T | jnp.eye(N, dtype=bool)).astype(jnp.float32)
    adj = adj / jnp.sum(adj, axis=1, keepdims=True)

    params = {
        "w1":  jax.random.normal(k1, (IN_DIM, HIDDEN), jnp.float32) * 0.1,
        "wl1": jax.random.normal(k2, (IN_DIM, HIDDEN), jnp.float32) * 0.1,
        "b1":  jax.random.normal(k5, (1, HIDDEN), jnp.float32) * 0.05,
        "w2":  jax.random.normal(k3, (HIDDEN, IN_DIM), jnp.float32) * 0.1,
        "wl2": jax.random.normal(k4, (HIDDEN, IN_DIM), jnp.float32) * 0.1,
        "b2":  jax.random.normal(k6, (1, IN_DIM), jnp.float32) * 0.05,
    }

    use_act = True  # GResBlock(..., activation=True) -> F.relu
    ref = _reference(x, adj, params, activation=use_act)

    # 1) f32 MXU operands: tight correctness check (only reassociation differs).
    out_f32 = jax.block_until_ready(
        gresblock(x, adj, params, activation=use_act, mxu_dtype=jnp.float32))
    assert out_f32.shape == (B, N, IN_DIM)
    assert jnp.allclose(out_f32, ref, atol=1e-4, rtol=1e-4)

    # 2) Fast path: bf16 adjacency/weights on the MXU, f32 accumulation.
    out_bf16 = jax.block_until_ready(
        gresblock(x, adj, params, activation=use_act))
    assert out_bf16.shape == (B, N, IN_DIM)
    assert jnp.allclose(out_bf16, ref, atol=5e-2, rtol=5e-2)

    print("KERNEL_OK")
</pallas_src>

<mosaic_0001>
module attributes {stable_mosaic.version = 11 : i64} {
  func.func @_gresblock_kernel(%arg0: i32, %arg1: memref<8x80xf32, #tpu.memory_space<vmem>>, %arg2: memref<80x80xf32, #tpu.memory_space<vmem>>, %arg3: memref<32x8xf32, #tpu.memory_space<vmem>>, %arg4: memref<32x8xf32, #tpu.memory_space<vmem>>, %arg5: memref<32x1xf32, #tpu.memory_space<vmem>>, %arg6: memref<8x32xf32, #tpu.memory_space<vmem>>, %arg7: memref<8x32xf32, #tpu.memory_space<vmem>>, %arg8: memref<8x1xf32, #tpu.memory_space<vmem>>, %arg9: memref<8x80xf32, #tpu.memory_space<vmem>>) attributes {dimension_semantics = [#tpu.dimension_semantics<parallel>], iteration_bounds = array<i64: 1>, scalar_prefetch = 0 : i64, scratch_operands = 0 : i64, tpu.core_type = #tpu.core_type<tc>, window_params = [{transform_indices = @transform_0, window_bounds = array<i64: 8, 80>}, {pipeline_mode = #tpu.pipeline_mode<synchronous>, transform_indices = @transform_1, window_bounds = array<i64: 80, 80>}, {pipeline_mode = #tpu.pipeline_mode<synchronous>, transform_indices = @transform_2, window_bounds = array<i64: 32, 8>}, {pipeline_mode = #tpu.pipeline_mode<synchronous>, transform_indices = @transform_3, window_bounds = array<i64: 32, 8>}, {pipeline_mode = #tpu.pipeline_mode<synchronous>, transform_indices = @transform_4, window_bounds = array<i64: 32, 1>}, {pipeline_mode = #tpu.pipeline_mode<synchronous>, transform_indices = @transform_5, window_bounds = array<i64: 8, 32>}, {pipeline_mode = #tpu.pipeline_mode<synchronous>, transform_indices = @transform_6, window_bounds = array<i64: 8, 32>}, {pipeline_mode = #tpu.pipeline_mode<synchronous>, transform_indices = @transform_7, window_bounds = array<i64: 8, 1>}, {transform_indices = @transform_8, window_bounds = array<i64: 8, 80>}]} {
    %c0 = arith.constant 0 : index
    %c0_0 = arith.constant 0 : index
    %0 = vector.load %arg3[%c0, %c0_0] : memref<32x8xf32, #tpu.memory_space<vmem>>, vector<32x8xf32>
    %c0_1 = arith.constant 0 : index
    %c0_2 = arith.constant 0 : index
    %1 = vector.load %arg4[%c0_1, %c0_2] : memref<32x8xf32, #tpu.memory_space<vmem>>, vector<32x8xf32>
    %c0_3 = arith.constant 0 : index
    %c0_4 = arith.constant 0 : index
    %2 = vector.load %arg5[%c0_3, %c0_4] : memref<32x1xf32, #tpu.memory_space<vmem>>, vector<32x1xf32>
    %c0_5 = arith.constant 0 : index
    %c0_6 = arith.constant 0 : index
    %3 = vector.load %arg6[%c0_5, %c0_6] : memref<8x32xf32, #tpu.memory_space<vmem>>, vector<8x32xf32>
    %c0_7 = arith.constant 0 : index
    %c0_8 = arith.constant 0 : index
    %4 = vector.load %arg7[%c0_7, %c0_8] : memref<8x32xf32, #tpu.memory_space<vmem>>, vector<8x32xf32>
    %c0_9 = arith.constant 0 : index
    %c0_10 = arith.constant 0 : index
    %5 = vector.load %arg8[%c0_9, %c0_10] : memref<8x1xf32, #tpu.memory_space<vmem>>, vector<8x1xf32>
    %c0_11 = arith.constant 0 : index
    %c0_12 = arith.constant 0 : index
    %6 = vector.load %arg2[%c0_11, %c0_12] : memref<80x80xf32, #tpu.memory_space<vmem>>, vector<80x80xf32>
    %c0_13 = arith.constant 0 : index
    %c0_14 = arith.constant 0 : index
    %7 = vector.load %arg1[%c0_13, %c0_14] : memref<8x80xf32, #tpu.memory_space<vmem>>, vector<8x80xf32>
    %cst = arith.constant dense<0.000000e+00> : vector<8x80xf32>
    %8 = tpu.matmul %7, %6, %cst {dimension_numbers = #tpu.dot_dimension_numbers<[1], [0], [0], [1], [0, 0, 1, 1], [], []>} : vector<8x80xf32>, vector<80x80xf32>, vector<8x80xf32> -> vector<8x80xf32>
    %cst_15 = arith.constant dense<0.000000e+00> : vector<32x80xf32>
    %9 = tpu.matmul %0, %8, %cst_15 {dimension_numbers = #tpu.dot_dimension_numbers<[1], [0], [0], [1], [0, 0, 1, 1], [], []>} : vector<32x8xf32>, vector<8x80xf32>, vector<32x80xf32> -> vector<32x80xf32>
    %cst_16 = arith.constant dense<0.000000e+00> : vector<32x80xf32>
    %10 = tpu.matmul %1, %7, %cst_16 {dimension_numbers = #tpu.dot_dimension_numbers<[1], [0], [0], [1], [0, 0, 1, 1], [], []>} : vector<32x8xf32>, vector<8x80xf32>, vector<32x80xf32> -> vector<32x80xf32>
    %11 = arith.addf %9, %10 : vector<32x80xf32>
    %12 = vector.broadcast %2 : vector<32x1xf32> to vector<32x80xf32>
    %13 = arith.addf %11, %12 : vector<32x80xf32>
    %cst_17 = arith.constant 0.000000e+00 : f32
    %14 = vector.broadcast %cst_17 : f32 to vector<32x80xf32>
    %15 = arith.maximumf %13, %14 : vector<32x80xf32>
    %cst_18 = arith.constant dense<0.000000e+00> : vector<8x80xf32>
    %16 = tpu.matmul %3, %15, %cst_18 {dimension_numbers = #tpu.dot_dimension_numbers<[1], [0], [0], [1], [0, 0, 1, 1], [], []>} : vector<8x32xf32>, vector<32x80xf32>, vector<8x80xf32> -> vector<8x80xf32>
    %cst_19 = arith.constant dense<0.000000e+00> : vector<8x80xf32>
    %17 = tpu.matmul %16, %6, %cst_19 {dimension_numbers = #tpu.dot_dimension_numbers<[1], [0], [0], [1], [0, 0, 1, 1], [], []>} : vector<8x80xf32>, vector<80x80xf32>, vector<8x80xf32> -> vector<8x80xf32>
    %cst_20 = arith.constant dense<0.000000e+00> : vector<8x80xf32>
    %18 = tpu.matmul %4, %15, %cst_20 {dimension_numbers = #tpu.dot_dimension_numbers<[1], [0], [0], [1], [0, 0, 1, 1], [], []>} : vector<8x32xf32>, vector<32x80xf32>, vector<8x80xf32> -> vector<8x80xf32>
    %19 = arith.addf %17, %18 : vector<8x80xf32>
    %20 = vector.broadcast %5 : vector<8x1xf32> to vector<8x80xf32>
    %21 = arith.addf %19, %20 : vector<8x80xf32>
    %cst_21 = arith.constant 0.000000e+00 : f32
    %22 = vector.broadcast %cst_21 : f32 to vector<8x80xf32>
    %23 = arith.maximumf %21, %22 : vector<8x80xf32>
    %24 = arith.addf %7, %23 : vector<8x80xf32>
    %cst_22 = arith.constant 5.000000e-01 : f32
    %25 = vector.broadcast %cst_22 : f32 to vector<8x80xf32>
    %26 = arith.mulf %24, %25 : vector<8x80xf32>
    %c0_23 = arith.constant 0 : index
    %c0_24 = arith.constant 0 : index
    %27 = vector.load %arg9[%c0_23, %c0_24] : memref<8x80xf32, #tpu.memory_space<vmem>>, vector<8x80xf32>
    tpu.vector_store %arg9[%c0_23, %c0_24], %26 {strides = array<i32>} : memref<8x80xf32, #tpu.memory_space<vmem>>, vector<8x80xf32>,
    return
  }
  func.func @transform_0(%arg0: i32) -> (i32, i32) {
    %c0_i32 = arith.constant 0 : i32
    %c0_i32_0 = arith.constant 0 : i32
    return %c0_i32, %arg0 : i32, i32
  }
  func.func @transform_1(%arg0: i32) -> (i32, i32) {
    %c0_i32 = arith.constant 0 : i32
    %c0_i32_0 = arith.constant 0 : i32
    %c0_i32_1 = arith.constant 0 : i32
    return %c0_i32, %c0_i32_0 : i32, i32
  }
  func.func @transform_2(%arg0: i32) -> (i32, i32) {
    %c0_i32 = arith.constant 0 : i32
    %c0_i32_0 = arith.constant 0 : i32
    %c0_i32_1 = arith.constant 0 : i32
    return %c0_i32, %c0_i32_0 : i32, i32
  }
  func.func @transform_3(%arg0: i32) -> (i32, i32) {
    %c0_i32 = arith.constant 0 : i32
    %c0_i32_0 = arith.constant 0 : i32
    %c0_i32_1 = arith.constant 0 : i32
    return %c0_i32, %c0_i32_0 : i32, i32
  }
  func.func @transform_4(%arg0: i32) -> (i32, i32) {
    %c0_i32 = arith.constant 0 : i32
    %c0_i32_0 = arith.constant 0 : i32
    %c0_i32_1 = arith.constant 0 : i32
    return %c0_i32, %c0_i32_0 : i32, i32
  }
  func.func @transform_5(%arg0: i32) -> (i32, i32) {
    %c0_i32 = arith.constant 0 : i32
    %c0_i32_0 = arith.constant 0 : i32
    %c0_i32_1 = arith.constant 0 : i32
    return %c0_i32, %c0_i32_0 : i32, i32
  }
  func.func @transform_6(%arg0: i32) -> (i32, i32) {
    %c0_i32 = arith.constant 0 : i32
    %c0_i32_0 = arith.constant 0 : i32
    %c0_i32_1 = arith.constant 0 : i32
    return %c0_i32, %c0_i32_0 : i32, i32
  }
  func.func @transform_7(%arg0: i32) -> (i32, i32) {
    %c0_i32 = arith.constant 0 : i32
    %c0_i32_0 = arith.constant 0 : i32
    %c0_i32_1 = arith.constant 0 : i32
    return %c0_i32, %c0_i32_0 : i32, i32
  }
  func.func @transform_8(%arg0: i32) -> (i32, i32) {
    %c0_i32 = arith.constant 0 : i32
    %c0_i32_0 = arith.constant 0 : i32
    return %c0_i32, %arg0 : i32, i32
  }
}

</mosaic_0001>

<llo_original>
// kernel: tpu_custom_call.1
$region0: #{tpu_custom_call.1}
  #allocation0 [shape = 'u32[]', space=smem, size = 0x4, offset = 0x4, fixed_abs, tag = 'smem constant byte address 0x4 - core index']
  #allocation1 [shape = 'u32[144,128]{1,0:T(1,128)}', space=vmem, size = 0x12000, scoped, tag = 'internal scratch']
  %s0 = inlined_call_operand.vmem [shape: f32[8,80], index: 0, kind: input, shape index: {}]
  %s1 = inlined_call_operand.vmem [shape: f32[80,80], index: 1, kind: input, shape index: {}]
  %s2 = inlined_call_operand.vmem [shape: f32[32,8], index: 2, kind: input, shape index: {}]
  %s3 = inlined_call_operand.vmem [shape: f32[32,8], index: 3, kind: input, shape index: {}]
  %s4 = inlined_call_operand.vmem [shape: f32[32,1], index: 4, kind: input, shape index: {}]
  %s5 = inlined_call_operand.vmem [shape: f32[8,32], index: 5, kind: input, shape index: {}]
  %s6 = inlined_call_operand.vmem [shape: f32[8,32], index: 6, kind: input, shape index: {}]
  %s7 = inlined_call_operand.vmem [shape: f32[8,1], index: 7, kind: input, shape index: {}]
  %s8 = inlined_call_operand.hbm [shape: f32[8,80], index: 8, kind: output, shape index: {}]
  %s9 = sld [smem:[#allocation0]]
  $region42: #{tpu_custom_call.1} parent=0
    _
  %s11 = ssub.s32 1, %s9
  %s12 = scalar_select 0, %s11, %s9
  $region1: #{tpu_custom_call.1} parent=0
    #allocation2 [shape = 'u8[4096]{0}', space=vmem, size = 0x1000, scoped, tag = 'output window, operand 0, single buffered']
    #allocation3 [shape = 's32[1]{0}', space=sflag, size = 0x4, scoped, tag = 'scoped memory for tpu_custom_call.1']
    %13 = vsyncpa [#allocation3], 0
    // Predicated region
    $region2: #{tpu_custom_call.1} parent=1 // pred_check
      _
    $region3: #{tpu_custom_call.1} parent=1 // pred_check_branch
      %15 = sbr.rel (0) target = $region5
    $region4: #{tpu_custom_call.1} parent=1 // pred_region
      _
    $region5: #{tpu_custom_call.1} parent=1 // pred_fallthru
      _
    // Predicated region
    $region6: #{tpu_custom_call.1} parent=1 // pred_check
      _
    $region7: #{tpu_custom_call.1} parent=1 // pred_check_branch
      %17 = sbr.rel (0) target = $region9
    $region8: #{tpu_custom_call.1} parent=1 // pred_region
      _
    $region9: #{tpu_custom_call.1} parent=1 // pred_fallthru
      _
    // Predicated region
    $region10: #{tpu_custom_call.1} parent=1 // pred_check
      _
    $region11: #{tpu_custom_call.1} parent=1 // pred_check_branch
      %19 = sbr.rel (0) target = $region13
    $region12: #{tpu_custom_call.1} parent=1 // pred_region
      _
    $region13: #{tpu_custom_call.1} parent=1 // pred_fallthru
      _
    // Predicated region
    $region14: #{tpu_custom_call.1} parent=1 // pred_check
      _
    $region15: #{tpu_custom_call.1} parent=1 // pred_check_branch
      %21 = sbr.rel (0) target = $region17
    $region16: #{tpu_custom_call.1} parent=1 // pred_region
      _
    $region17: #{tpu_custom_call.1} parent=1 // pred_fallthru
      _
    // Predicated region
    $region18: #{tpu_custom_call.1} parent=1 // pred_check
      _
    $region19: #{tpu_custom_call.1} parent=1 // pred_check_branch
      %23 = sbr.rel (0) target = $region21
    $region20: #{tpu_custom_call.1} parent=1 // pred_region
      _
    $region21: #{tpu_custom_call.1} parent=1 // pred_fallthru
      _
    // Predicated region
    $region22: #{tpu_custom_call.1} parent=1 // pred_check
      _
    $region23: #{tpu_custom_call.1} parent=1 // pred_check_branch
      %25 = sbr.rel (0) target = $region25
    $region24: #{tpu_custom_call.1} parent=1 // pred_region
      _
    $region25: #{tpu_custom_call.1} parent=1 // pred_fallthru
      _
    // Predicated region
    $region26: #{tpu_custom_call.1} parent=1 // pred_check
      _
    $region27: #{tpu_custom_call.1} parent=1 // pred_check_branch
      %27 = sbr.rel (0) target = $region29
    $region28: #{tpu_custom_call.1} parent=1 // pred_region
      _
    $region29: #{tpu_custom_call.1} parent=1 // pred_fallthru
      _
    // Predicated region
    $region30: #{tpu_custom_call.1} parent=1 // pred_check
      _
    $region31: #{tpu_custom_call.1} parent=1 // pred_check_branch
      %29 = sbr.rel (0) target = $region33
    $region32: #{tpu_custom_call.1} parent=1 // pred_region
      _
    $region33: #{tpu_custom_call.1} parent=1 // pred_fallthru
      _
    %v30 = vld [vmem:[%s2] sm:$0xff]
    %v31 = vld [vmem:[%s2 + $0x8] sm:$0xff]
    %v32 = vld [vmem:[%s2 + $0x10] sm:$0xff]
    %v33 = vld [vmem:[%s2 + $0x18] sm:$0xff]
    %v34 = vld [vmem:[%s3] sm:$0xff]
    %v35 = vld [vmem:[%s3 + $0x8] sm:$0xff]
    %v36 = vld [vmem:[%s3 + $0x10] sm:$0xff]
    %v37 = vld [vmem:[%s3 + $0x18] sm:$0xff]
    %v38 = vld [vmem:[%s4] sm:$0xff]
    %v39 = vld [vmem:[%s4 + $0x8] sm:$0xff]
    %v40 = vld [vmem:[%s4 + $0x10] sm:$0xff]
    %v41 = vld [vmem:[%s4 + $0x18] sm:$0xff]
    %v42 = vld [vmem:[%s5] sm:$0xff]
    %v43 = vld [vmem:[%s6] sm:$0xff]
    %v44 = vld [vmem:[%s7] sm:$0xff]
    %v45 = vld [vmem:[%s1] sm:$0xff]
    %v46 = vld [vmem:[%s1 + $0x8] sm:$0xff]
    %v47 = vld [vmem:[%s1 + $0x10] sm:$0xff]
    %v48 = vld [vmem:[%s1 + $0x18] sm:$0xff]
    %v49 = vld [vmem:[%s1 + $0x20] sm:$0xff]
    %v50 = vld [vmem:[%s1 + $0x28] sm:$0xff]
    %v51 = vld [vmem:[%s1 + $0x30] sm:$0xff]
    %v52 = vld [vmem:[%s1 + $0x38] sm:$0xff]
    %v53 = vld [vmem:[%s1 + $0x40] sm:$0xff]
    %v54 = vld [vmem:[%s1 + $0x48] sm:$0xff]
    %v55 = vld [vmem:[%s0] sm:$0xff]
    %vm56 = vcmask 654336
    %v58 = vsel %vm56, %v55, 0
    %60 = vmatprep.subr.mxu0 0.0
    %61 = vmatpush1.msra.mxu0 %v45
    %62 = vmatprep.subr.mxu0 0.0
    %63 = vmatpush1.msra.mxu0 %v46
    %64 = vmatprep.subr.mxu0 0.0
    %65 = vmatpush1.msra.mxu0 %v47
    %66 = vmatprep.subr.mxu0 0.0
    %67 = vmatpush1.msra.mxu0 %v48
    %68 = vmatprep.subr.mxu0 0.0
    %69 = vmatpush1.msra.mxu0 %v49
    %70 = vmatprep.subr.mxu0 0.0
    %71 = vmatpush1.msra.mxu0 %v50
    %72 = vmatprep.subr.mxu0 0.0
    %73 = vmatpush1.msra.mxu0 %v51
    %74 = vmatprep.subr.mxu0 0.0
    %75 = vmatpush1.msra.mxu0 %v52
    %76 = vmatprep.subr.mxu0 0.0
    %77 = vmatpush1.msra.mxu0 %v53
    %78 = vmatprep.subr.mxu0 0.0
    %79 = vmatpush1.msra.mxu0 %v54
    %80 = vmatprep.subr.mxu0 0.0
    %81 = vmatpush1.msra.mxu0 0.0
    %82 = vmatprep.subr.mxu0 0.0
    %83 = vmatpush1.msra.mxu0 0.0
    %84 = vmatprep.subr.mxu0 0.0
    %85 = vmatpush1.msra.mxu0 0.0
    %86 = vmatprep.subr.mxu0 0.0
    %87 = vmatpush1.msra.mxu0 0.0
    %88 = vmatprep.subr.mxu0 0.0
    %89 = vmatpush1.msra.mxu0 0.0
    %90 = vmatprep.subr.mxu0 0.0
    %91 = vmatpush1.msra.mxu0 0.0
    %92 = vmatprep.subr.mxu0 0.0
    %93 = vmatpush1.msra.mxu0 0.0
    %94 = vmatprep.subr.mxu0 0.0
    %95 = vmatpush1.msra.mxu0 0.0
    %96 = vmatprep.subr.mxu0 0.0
    %97 = vmatpush1.msra.mxu0 0.0
    %98 = vmatprep.subr.mxu0 0.0
    %99 = vmatpush1.msra.mxu0 0.0
    %100 = vmatprep.subr.mxu0 0.0
    %101 = vmatpush1.msra.mxu0 0.0
    %102 = vmatprep.subr.mxu0 0.0
    %103 = vmatpush1.msra.mxu0 0.0
    %104 = vmatprep.subr.mxu0 0.0
    %105 = vmatpush1.msra.mxu0 0.0
    %106 = vmatprep.subr.mxu0 0.0
    %107 = vmatpush1.msra.mxu0 0.0
    %108 = vmatprep.subr.mxu0 0.0
    %109 = vmatpush1.msra.mxu0 0.0
    %110 = vmatprep.subr.mxu0 0.0
    %111 = vmatpush1.msra.mxu0 0.0
    %112 = vmatprep.subr.mxu0 0.0
    %113 = vmatpush1.msra.mxu0 0.0
    %114 = vmatprep.subr.mxu0 0.0
    %115 = vmatpush1.msra.mxu0 0.0
    %116 = vmatprep.subr.mxu0 0.0
    %117 = vmatpush1.msra.mxu0 0.0
    %118 = vmatprep.subr.mxu0 0.0
    %119 = vmatpush1.msra.mxu0 0.0
    %120 = vmatprep.subr.mxu0 0.0
    %121 = vmatpush1.msra.mxu0 0.0
    %122 = vmatprep.subr.mxu0 0.0
    %123 = vmatpush1.msra.mxu0 0.0
    %124 = vmatprep.mubr.f32.mxu0 0.0
    %125 = vmatmul.mubr.f32.gmra.mrb[0].mxu0 %v58
    %v126 = vpop.f32.mrb[0].mxu0
    %v127 = vadd.f32 0.0, %v126
    %v128 = vpop.f32.mrb[0].mxu0
    %129 = vdwg.mxu0
    %vm130 = vcmask 64512
    %v132 = vsel %vm130, %v34, 0
    %v135 = vsel %vm130, %v35, 0
    %v138 = vsel %vm130, %v36, 0
    %v141 = vsel %vm130, %v37, 0
    %143 = vmatprep.subr.mxu0 0.0
    %144 = vmatpush1.msra.mxu0 %v55
    %145 = vmatprep.subr.mxu0 0.0
    %146 = vmatpush1.msra.mxu0 0.0
    %147 = vmatprep.subr.mxu0 0.0
    %148 = vmatpush1.msra.mxu0 0.0
    %149 = vmatprep.subr.mxu0 0.0
    %150 = vmatpush1.msra.mxu0 0.0
    %151 = vmatprep.subr.mxu0 0.0
    %152 = vmatpush1.msra.mxu0 0.0
    %153 = vmatprep.subr.mxu0 0.0
    %154 = vmatpush1.msra.mxu0 0.0
    %155 = vmatprep.subr.mxu0 0.0
    %156 = vmatpush1.msra.mxu0 0.0
    %157 = vmatprep.subr.mxu0 0.0
    %158 = vmatpush1.msra.mxu0 0.0
    %159 = vmatprep.subr.mxu0 0.0
    %160 = vmatpush1.msra.mxu0 0.0
    %161 = vmatprep.subr.mxu0 0.0
    %162 = vmatpush1.msra.mxu0 0.0
    %163 = vmatprep.subr.mxu0 0.0
    %164 = vmatpush1.msra.mxu0 0.0
    %165 = vmatprep.subr.mxu0 0.0
    %166 = vmatpush1.msra.mxu0 0.0
    %167 = vmatprep.subr.mxu0 0.0
    %168 = vmatpush1.msra.mxu0 0.0
    %169 = vmatprep.subr.mxu0 0.0
    %170 = vmatpush1.msra.mxu0 0.0
    %171 = vmatprep.subr.mxu0 0.0
    %172 = vmatpush1.msra.mxu0 0.0
    %173 = vmatprep.subr.mxu0 0.0
    %174 = vmatpush1.msra.mxu0 0.0
    %175 = vmatprep.subr.mxu0 0.0
    %176 = vmatpush1.msra.mxu0 0.0
    %177 = vmatprep.subr.mxu0 0.0
    %178 = vmatpush1.msra.mxu0 0.0
    %179 = vmatprep.subr.mxu0 0.0
    %180 = vmatpush1.msra.mxu0 0.0
    %181 = vmatprep.subr.mxu0 0.0
    %182 = vmatpush1.msra.mxu0 0.0
    %183 = vmatprep.subr.mxu0 0.0
    %184 = vmatpush1.msra.mxu0 0.0
    %185 = vmatprep.subr.mxu0 0.0
    %186 = vmatpush1.msra.mxu0 0.0
    %187 = vmatprep.subr.mxu0 0.0
    %188 = vmatpush1.msra.mxu0 0.0
    %189 = vmatprep.subr.mxu0 0.0
    %190 = vmatpush1.msra.mxu0 0.0
    %191 = vmatprep.subr.mxu0 0.0
    %192 = vmatpush1.msra.mxu0 0.0
    %193 = vmatprep.subr.mxu0 0.0
    %194 = vmatpush1.msra.mxu0 0.0
    %195 = vmatprep.subr.mxu0 0.0
    %196 = vmatpush1.msra.mxu0 0.0
    %197 = vmatprep.subr.mxu0 0.0
    %198 = vmatpush1.msra.mxu0 0.0
    %199 = vmatprep.subr.mxu0 0.0
    %200 = vmatpush1.msra.mxu0 0.0
    %201 = vmatprep.subr.mxu0 0.0
    %202 = vmatpush1.msra.mxu0 0.0
    %203 = vmatprep.subr.mxu0 0.0
    %204 = vmatpush1.msra.mxu0 0.0
    %205 = vmatprep.subr.mxu0 0.0
    %206 = vmatpush1.msra.mxu0 0.0
    %207 = vmatprep.mubr.f32.mxu0 0.0
    %208 = vmatmul.mubr.f32.gmra.mrb[0].mxu0 %v132
    %v209 = vpop.f32.mrb[0].mxu0
    %v210 = vadd.f32 0.0, %v209
    %v211 = vpop.f32.mrb[0].mxu0
    %212 = vmatprep.mubr.f32.mxu0 0.0
    %213 = vmatmul.mubr.f32.gmra.mrb[0].mxu0 %v135
    %v214 = vpop.f32.mrb[0].mxu0
    %v215 = vadd.f32 0.0, %v214
    %v216 = vpop.f32.mrb[0].mxu0
    %217 = vmatprep.mubr.f32.mxu0 0.0
    %218 = vmatmul.mubr.f32.gmra.mrb[0].mxu0 %v138
    %v219 = vpop.f32.mrb[0].mxu0
    %v220 = vadd.f32 0.0, %v219
    %v221 = vpop.f32.mrb[0].mxu0
    %222 = vmatprep.mubr.f32.mxu0 0.0
    %223 = vmatmul.mubr.f32.gmra.mrb[0].mxu0 %v141
    %v224 = vpop.f32.mrb[0].mxu0
    %v225 = vadd.f32 0.0, %v224
    %v226 = vpop.f32.mrb[0].mxu0
    %227 = vdwg.mxu0
    %v229 = vsel %vm130, %v30, 0
    %v232 = vsel %vm130, %v31, 0
    %v235 = vsel %vm130, %v32, 0
    %v238 = vsel %vm130, %v33, 0
    %240 = vmatprep.subr.mxu0 0.0
    %241 = vmatpush1.msra.mxu0 %v127
    %242 = vmatprep.subr.mxu0 0.0
    %243 = vmatpush1.msra.mxu0 0.0
    %244 = vmatprep.subr.mxu0 0.0
    %245 = vmatpush1.msra.mxu0 0.0
    %246 = vmatprep.subr.mxu0 0.0
    %247 = vmatpush1.msra.mxu0 0.0
    %248 = vmatprep.subr.mxu0 0.0
    %249 = vmatpush1.msra.mxu0 0.0
    %250 = vmatprep.subr.mxu0 0.0
    %251 = vmatpush1.msra.mxu0 0.0
    %252 = vmatprep.subr.mxu0 0.0
    %253 = vmatpush1.msra.mxu0 0.0
    %254 = vmatprep.subr.mxu0 0.0
    %255 = vmatpush1.msra.mxu0 0.0
    %256 = vmatprep.subr.mxu0 0.0
    %257 = vmatpush1.msra.mxu0 0.0
    %258 = vmatprep.subr.mxu0 0.0
    %259 = vmatpush1.msra.mxu0 0.0
    %260 = vmatprep.subr.mxu0 0.0
    %261 = vmatpush1.msra.mxu0 0.0
    %262 = vmatprep.subr.mxu0 0.0
    %263 = vmatpush1.msra.mxu0 0.0
    %264 = vmatprep.subr.mxu0 0.0
    %265 = vmatpush1.msra.mxu0 0.0
    %266 = vmatprep.subr.mxu0 0.0
    %267 = vmatpush1.msra.mxu0 0.0
    %268 = vmatprep.subr.mxu0 0.0
    %269 = vmatpush1.msra.mxu0 0.0
    %270 = vmatprep.subr.mxu0 0.0
    %271 = vmatpush1.msra.mxu0 0.0
    %272 = vmatprep.subr.mxu0 0.0
    %273 = vmatpush1.msra.mxu0 0.0
    %274 = vmatprep.subr.mxu0 0.0
    %275 = vmatpush1.msra.mxu0 0.0
    %276 = vmatprep.subr.mxu0 0.0
    %277 = vmatpush1.msra.mxu0 0.0
    %278 = vmatprep.subr.mxu0 0.0
    %279 = vmatpush1.msra.mxu0 0.0
    %280 = vmatprep.subr.mxu0 0.0
    %281 = vmatpush1.msra.mxu0 0.0
    %282 = vmatprep.subr.mxu0 0.0
    %283 = vmatpush1.msra.mxu0 0.0
    %284 = vmatprep.subr.mxu0 0.0
    %285 = vmatpush1.msra.mxu0 0.0
    %286 = vmatprep.subr.mxu0 0.0
    %287 = vmatpush1.msra.mxu0 0.0
    %288 = vmatprep.subr.mxu0 0.0
    %289 = vmatpush1.msra.mxu0 0.0
    %290 = vmatprep.subr.mxu0 0.0
    %291 = vmatpush1.msra.mxu0 0.0
    %292 = vmatprep.subr.mxu0 0.0
    %293 = vmatpush1.msra.mxu0 0.0
    %294 = vmatprep.subr.mxu0 0.0
    %295 = vmatpush1.msra.mxu0 0.0
    %296 = vmatprep.subr.mxu0 0.0
    %297 = vmatpush1.msra.mxu0 0.0
    %298 = vmatprep.subr.mxu0 0.0
    %299 = vmatpush1.msra.mxu0 0.0
    %300 = vmatprep.subr.mxu0 0.0
    %301 = vmatpush1.msra.mxu0 0.0
    %302 = vmatprep.subr.mxu0 0.0
    %303 = vmatpush1.msra.mxu0 0.0
    %304 = vmatprep.mubr.f32.mxu0 0.0
    %305 = vmatmul.mubr.f32.gmra.mrb[0].mxu0 %v229
    %v306 = vpop.f32.mrb[0].mxu0
    %v307 = vadd.f32 %v210, %v306
    %v308 = vpop.f32.mrb[0].mxu0
    %309 = vmatprep.mubr.f32.mxu0 0.0
    %310 = vmatmul.mubr.f32.gmra.mrb[0].mxu0 %v232
    %v311 = vpop.f32.mrb[0].mxu0
    %v312 = vadd.f32 %v215, %v311
    %v313 = vpop.f32.mrb[0].mxu0
    %314 = vmatprep.mubr.f32.mxu0 0.0
    %315 = vmatmul.mubr.f32.gmra.mrb[0].mxu0 %v235
    %v316 = vpop.f32.mrb[0].mxu0
    %v317 = vadd.f32 %v220, %v316
    %v318 = vpop.f32.mrb[0].mxu0
    %319 = vmatprep.mubr.f32.mxu0 0.0
    %320 = vmatmul.mubr.f32.gmra.mrb[0].mxu0 %v238
    %v321 = vpop.f32.mrb[0].mxu0
    %v322 = vadd.f32 %v225, %v321
    %v323 = vpop.f32.mrb[0].mxu0
    %324 = vdwg.mxu0
    %326 = vset.pattern.permute.xlu0 0
    %327 = vperm.xlu0 %326, %v38
    %v328 = vpop.permute.xlu0 %327
    %331 = vset.pattern.permute.xlu0 0
    %332 = vperm.xlu0 %331, %v39
    %v333 = vpop.permute.xlu0 %332
    %336 = vset.pattern.permute.xlu0 0
    %337 = vperm.xlu0 %336, %v40
    %v338 = vpop.permute.xlu0 %337
    %341 = vset.pattern.permute.xlu0 0
    %342 = vperm.xlu0 %341, %v41
    %v343 = vpop.permute.xlu0 %342
    %v345 = vadd.f32 %v307, %v328
    %v346 = vadd.f32 %v312, %v333
    %v347 = vadd.f32 %v317, %v338
    %v348 = vadd.f32 %v322, %v343
    %v349 = vmax.f32 %v345, 0.0
    %v350 = vmax.f32 %v346, 0.0
    %v351 = vmax.f32 %v347, 0.0
    %v352 = vmax.f32 %v348, 0.0
    %vm353 = vcmask 261120
    %v355 = vsel %vm353, %v42, 0
    %357 = vmatprep.subr.mxu0 0.0
    %358 = vmatpush1.msra.mxu0 %v349
    %359 = vmatprep.subr.mxu0 0.0
    %360 = vmatpush1.msra.mxu0 %v350
    %361 = vmatprep.subr.mxu0 0.0
    %362 = vmatpush1.msra.mxu0 %v351
    %363 = vmatprep.subr.mxu0 0.0
    %364 = vmatpush1.msra.mxu0 %v352
    %365 = vmatprep.subr.mxu0 0.0
    %366 = vmatpush1.msra.mxu0 0.0
    %367 = vmatprep.subr.mxu0 0.0
    %368 = vmatpush1.msra.mxu0 0.0
    %369 = vmatprep.subr.mxu0 0.0
    %370 = vmatpush1.msra.mxu0 0.0
    %371 = vmatprep.subr.mxu0 0.0
    %372 = vmatpush1.msra.mxu0 0.0
    %373 = vmatprep.subr.mxu0 0.0
    %374 = vmatpush1.msra.mxu0 0.0
    %375 = vmatprep.subr.mxu0 0.0
    %376 = vmatpush1.msra.mxu0 0.0
    %377 = vmatprep.subr.mxu0 0.0
    %378 = vmatpush1.msra.mxu0 0.0
    %379 = vmatprep.subr.mxu0 0.0
    %380 = vmatpush1.msra.mxu0 0.0
    %381 = vmatprep.subr.mxu0 0.0
    %382 = vmatpush1.msra.mxu0 0.0
    %383 = vmatprep.subr.mxu0 0.0
    %384 = vmatpush1.msra.mxu0 0.0
    %385 = vmatprep.subr.mxu0 0.0
    %386 = vmatpush1.msra.mxu0 0.0
    %387 = vmatprep.subr.mxu0 0.0
    %388 = vmatpush1.msra.mxu0 0.0
    %389 = vmatprep.subr.mxu0 0.0
    %390 = vmatpush1.msra.mxu0 0.0
    %391 = vmatprep.subr.mxu0 0.0
    %392 = vmatpush1.msra.mxu0 0.0
    %393 = vmatprep.subr.mxu0 0.0
    %394 = vmatpush1.msra.mxu0 0.0
    %395 = vmatprep.subr.mxu0 0.0
    %396 = vmatpush1.msra.mxu0 0.0
    %397 = vmatprep.subr.mxu0 0.0
    %398 = vmatpush1.msra.mxu0 0.0
    %399 = vmatprep.subr.mxu0 0.0
    %400 = vmatpush1.msra.mxu0 0.0
    %401 = vmatprep.subr.mxu0 0.0
    %402 = vmatpush1.msra.mxu0 0.0
    %403 = vmatprep.subr.mxu0 0.0
    %404 = vmatpush1.msra.mxu0 0.0
    %405 = vmatprep.subr.mxu0 0.0
    %406 = vmatpush1.msra.mxu0 0.0
    %407 = vmatprep.subr.mxu0 0.0
    %408 = vmatpush1.msra.mxu0 0.0
    %409 = vmatprep.subr.mxu0 0.0
    %410 = vmatpush1.msra.mxu0 0.0
    %411 = vmatprep.subr.mxu0 0.0
    %412 = vmatpush1.msra.mxu0 0.0
    %413 = vmatprep.subr.mxu0 0.0
    %414 = vmatpush1.msra.mxu0 0.0
    %415 = vmatprep.subr.mxu0 0.0
    %416 = vmatpush1.msra.mxu0 0.0
    %417 = vmatprep.subr.mxu0 0.0
    %418 = vmatpush1.msra.mxu0 0.0
    %419 = vmatprep.subr.mxu0 0.0
    %420 = vmatpush1.msra.mxu0 0.0
    %421 = vmatprep.mubr.f32.mxu0 0.0
    %422 = vmatmul.mubr.f32.gmra.mrb[0].mxu0 %v355
    %v423 = vpop.f32.mrb[0].mxu0
    %v424 = vadd.f32 0.0, %v423
    %v425 = vpop.f32.mrb[0].mxu0
    %426 = vdwg.mxu0
    %v428 = vsel %vm353, %v43, 0
    %430 = vmatprep.subr.mxu0 0.0
    %431 = vmatpush1.msra.mxu0 %v349
    %432 = vmatprep.subr.mxu0 0.0
    %433 = vmatpush1.msra.mxu0 %v350
    %434 = vmatprep.subr.mxu0 0.0
    %435 = vmatpush1.msra.mxu0 %v351
    %436 = vmatprep.subr.mxu0 0.0
    %437 = vmatpush1.msra.mxu0 %v352
    %438 = vmatprep.subr.mxu0 0.0
    %439 = vmatpush1.msra.mxu0 0.0
    %440 = vmatprep.subr.mxu0 0.0
    %441 = vmatpush1.msra.mxu0 0.0
    %442 = vmatprep.subr.mxu0 0.0
    %443 = vmatpush1.msra.mxu0 0.0
    %444 = vmatprep.subr.mxu0 0.0
    %445 = vmatpush1.msra.mxu0 0.0
    %446 = vmatprep.subr.mxu0 0.0
    %447 = vmatpush1.msra.mxu0 0.0
    %448 = vmatprep.subr.mxu0 0.0
    %449 = vmatpush1.msra.mxu0 0.0
    %450 = vmatprep.subr.mxu0 0.0
    %451 = vmatpush1.msra.mxu0 0.0
    %452 = vmatprep.subr.mxu0 0.0
    %453 = vmatpush1.msra.mxu0 0.0
    %454 = vmatprep.subr.mxu0 0.0
    %455 = vmatpush1.msra.mxu0 0.0
    %456 = vmatprep.subr.mxu0 0.0
    %457 = vmatpush1.msra.mxu0 0.0
    %458 = vmatprep.subr.mxu0 0.0
    %459 = vmatpush1.msra.mxu0 0.0
    %460 = vmatprep.subr.mxu0 0.0
    %461 = vmatpush1.msra.mxu0 0.0
    %462 = vmatprep.subr.mxu0 0.0
    %463 = vmatpush1.msra.mxu0 0.0
    %464 = vmatprep.subr.mxu0 0.0
    %465 = vmatpush1.msra.mxu0 0.0
    %466 = vmatprep.subr.mxu0 0.0
    %467 = vmatpush1.msra.mxu0 0.0
    %468 = vmatprep.subr.mxu0 0.0
    %469 = vmatpush1.msra.mxu0 0.0
    %470 = vmatprep.subr.mxu0 0.0
    %471 = vmatpush1.msra.mxu0 0.0
    %472 = vmatprep.subr.mxu0 0.0
    %473 = vmatpush1.msra.mxu0 0.0
    %474 = vmatprep.subr.mxu0 0.0
    %475 = vmatpush1.msra.mxu0 0.0
    %476 = vmatprep.subr.mxu0 0.0
    %477 = vmatpush1.msra.mxu0 0.0
    %478 = vmatprep.subr.mxu0 0.0
    %479 = vmatpush1.msra.mxu0 0.0
    %480 = vmatprep.subr.mxu0 0.0
    %481 = vmatpush1.msra.mxu0 0.0
    %482 = vmatprep.subr.mxu0 0.0
    %483 = vmatpush1.msra.mxu0 0.0
    %484 = vmatprep.subr.mxu0 0.0
    %485 = vmatpush1.msra.mxu0 0.0
    %486 = vmatprep.subr.mxu0 0.0
    %487 = vmatpush1.msra.mxu0 0.0
    %488 = vmatprep.subr.mxu0 0.0
    %489 = vmatpush1.msra.mxu0 0.0
    %490 = vmatprep.subr.mxu0 0.0
    %491 = vmatpush1.msra.mxu0 0.0
    %492 = vmatprep.subr.mxu0 0.0
    %493 = vmatpush1.msra.mxu0 0.0
    %494 = vmatprep.mubr.f32.mxu0 0.0
    %495 = vmatmul.mubr.f32.gmra.mrb[0].mxu0 %v428
    %v496 = vpop.f32.mrb[0].mxu0
    %v497 = vadd.f32 0.0, %v496
    %v498 = vpop.f32.mrb[0].mxu0
    %499 = vdwg.mxu0
    %v501 = vsel %vm56, %v424, 0
    %503 = vmatprep.subr.mxu0 0.0
    %504 = vmatpush1.msra.mxu0 %v45
    %505 = vmatprep.subr.mxu0 0.0
    %506 = vmatpush1.msra.mxu0 %v46
    %507 = vmatprep.subr.mxu0 0.0
    %508 = vmatpush1.msra.mxu0 %v47
    %509 = vmatprep.subr.mxu0 0.0
    %510 = vmatpush1.msra.mxu0 %v48
    %511 = vmatprep.subr.mxu0 0.0
    %512 = vmatpush1.msra.mxu0 %v49
    %513 = vmatprep.subr.mxu0 0.0
    %514 = vmatpush1.msra.mxu0 %v50
    %515 = vmatprep.subr.mxu0 0.0
    %516 = vmatpush1.msra.mxu0 %v51
    %517 = vmatprep.subr.mxu0 0.0
    %518 = vmatpush1.msra.mxu0 %v52
    %519 = vmatprep.subr.mxu0 0.0
    %520 = vmatpush1.msra.mxu0 %v53
    %521 = vmatprep.subr.mxu0 0.0
    %522 = vmatpush1.msra.mxu0 %v54
    %523 = vmatprep.subr.mxu0 0.0
    %524 = vmatpush1.msra.mxu0 0.0
    %525 = vmatprep.subr.mxu0 0.0
    %526 = vmatpush1.msra.mxu0 0.0
    %527 = vmatprep.subr.mxu0 0.0
    %528 = vmatpush1.msra.mxu0 0.0
    %529 = vmatprep.subr.mxu0 0.0
    %530 = vmatpush1.msra.mxu0 0.0
    %531 = vmatprep.subr.mxu0 0.0
    %532 = vmatpush1.msra.mxu0 0.0
    %533 = vmatprep.subr.mxu0 0.0
    %534 = vmatpush1.msra.mxu0 0.0
    %535 = vmatprep.subr.mxu0 0.0
    %536 = vmatpush1.msra.mxu0 0.0
    %537 = vmatprep.subr.mxu0 0.0
    %538 = vmatpush1.msra.mxu0 0.0
    %539 = vmatprep.subr.mxu0 0.0
    %540 = vmatpush1.msra.mxu0 0.0
    %541 = vmatprep.subr.mxu0 0.0
    %542 = vmatpush1.msra.mxu0 0.0
    %543 = vmatprep.subr.mxu0 0.0
    %544 = vmatpush1.msra.mxu0 0.0
    %545 = vmatprep.subr.mxu0 0.0
    %546 = vmatpush1.msra.mxu0 0.0
    %547 = vmatprep.subr.mxu0 0.0
    %548 = vmatpush1.msra.mxu0 0.0
    %549 = vmatprep.subr.mxu0 0.0
    %550 = vmatpush1.msra.mxu0 0.0
    %551 = vmatprep.subr.mxu0 0.0
    %552 = vmatpush1.msra.mxu0 0.0
    %553 = vmatprep.subr.mxu0 0.0
    %554 = vmatpush1.msra.mxu0 0.0
    %555 = vmatprep.subr.mxu0 0.0
    %556 = vmatpush1.msra.mxu0 0.0
    %557 = vmatprep.subr.mxu0 0.0
    %558 = vmatpush1.msra.mxu0 0.0
    %559 = vmatprep.subr.mxu0 0.0
    %560 = vmatpush1.msra.mxu0 0.0
    %561 = vmatprep.subr.mxu0 0.0
    %562 = vmatpush1.msra.mxu0 0.0
    %563 = vmatprep.subr.mxu0 0.0
    %564 = vmatpush1.msra.mxu0 0.0
    %565 = vmatprep.subr.mxu0 0.0
    %566 = vmatpush1.msra.mxu0 0.0
    %567 = vmatprep.mubr.f32.mxu0 0.0
    %568 = vmatmul.mubr.f32.gmra.mrb[0].mxu0 %v501
    %v569 = vpop.f32.mrb[0].mxu0
    %v570 = vadd.f32 %v497, %v569
    %v571 = vpop.f32.mrb[0].mxu0
    %572 = vdwg.mxu0
    %574 = vset.pattern.permute.xlu0 0
    %575 = vperm.xlu0 %574, %v44
    %v576 = vpop.permute.xlu0 %575
    %v578 = vadd.f32 %v570, %v576
    %v579 = vmax.f32 %v578, 0.0
    %v580 = vadd.f32 %v55, %v579
    %v581 = vmul.f32 %v580, 0.5
    %582 = vst.msk [vmem:[#allocation2] sm:$0xff] %vm56, %v581
    // Predicated region
    $region34: #{tpu_custom_call.1} parent=1 // pred_check
      _
    $region35: #{tpu_custom_call.1} parent=1 // pred_check_branch
      %584 = sbr.rel (0) target = $region37
    $region36: #{tpu_custom_call.1} parent=1 // pred_region
      %s586 = ssub.s32 128, 128
      %587 = vsyncadd [#allocation3], %s586
      %s589 = sshll.u32 [#allocation2], 4
      %s590 = int_to_ptr.vmem [resolvable:$true] %s589
      %592 = dma.vmem_to_hbm [thread:$0]  %s590, 128, %s8, [#allocation3]
    $region37: #{tpu_custom_call.1} parent=1 // pred_fallthru
      _
    // Predicated region
    $region38: #{tpu_custom_call.1} parent=1 // pred_check
      _
    $region39: #{tpu_custom_call.1} parent=1 // pred_check_branch
      %594 = sbr.rel (0) target = $region41
    $region40: #{tpu_custom_call.1} parent=1 // pred_region
      %595 = dma.done [#allocation3], 128
    $region41: #{tpu_custom_call.1} parent=1 // pred_fallthru
      _
    %596 = vsyncpa [#allocation3], 1

</llo_original>
